<compile_context>
chip_gen: v5e
topology: v5e:2x2
jax: 0.10.0
libtpu: 0.0.40
codegen_flags: <defaults>
</compile_context>

<pallas_src>
import functools

import jax
import jax.numpy as jnp
from jax.experimental import pallas as pl
from jax.experimental.pallas import tpu as pltpu

MAX_NET_CHUNK = 1024   # max matmul contraction width per grid step
MAX_X_TILE = 512       # x-bin tile size for the "parallel" grid axis


def _round_up(x, m):
    return ((x + m - 1) // m) * m


def _net_density_kernel(xpack_ref, ypack_ref, binxl_ref, binyl_ref,
                        h_ref, v_ref, *, bin_size_x, bin_size_y):
    c = pl.program_id(1)   # net-chunk axis (reduction, last grid axis)

    # ---- accumulator init on the first net chunk of this bin tile ----
    @pl.when(c == 0)
    def _init():
        h_ref[...] = jnp.zeros_like(h_ref)
        v_ref[...] = jnp.zeros_like(v_ref)

    # x-side per-net data, nets along lanes: rows = [xmin, xmax, cH, cV, ...]
    xmin = xpack_ref[0:1, :]                   # (1, NC)
    xmax = xpack_ref[1:2, :]
    ch = xpack_ref[2:3, :]
    cv = xpack_ref[3:4, :]
    # y-side per-net data, nets along sublanes: cols = [ymin, ymax]
    ypk = ypack_ref[...]                       # (NC, 2)
    ymin = ypk[:, 0:1]                         # (NC, 1)
    ymax = ypk[:, 1:2]

    bin_xl = binxl_ref[...]                    # (X_TILE, 1)
    bin_xh = bin_xl + bin_size_x
    bin_yl = binyl_ref[...]                    # (1, nby_pad)
    bin_yh = bin_yl + bin_size_y

    # per-(bin, net) / (net, bin) overlap lengths, separable in x and y
    ox = jnp.maximum(jnp.minimum(xmax, bin_xh) - jnp.maximum(xmin, bin_xl),
                     0.0)                      # (X_TILE, NC)
    oy = jnp.maximum(jnp.minimum(ymax, bin_yh) - jnp.maximum(ymin, bin_yl),
                     0.0)                      # (NC, nby_pad)

    # H[ix,iy] = sum_n cH[n]*ox[ix,n]*oy[n,iy]; V likewise.  Coefficients fold
    # into the (smaller) LHS; oy is built & stored once and reused by both dots.
    dn = (((1,), (0,)), ((), ()))              # canonical contraction (no LHS transpose)
    h_ref[...] += jax.lax.dot_general(ox * ch, oy, dn,
                                      preferred_element_type=jnp.float32)
    v_ref[...] += jax.lax.dot_general(ox * cv, oy, dn,
                                      preferred_element_type=jnp.float32)


def net_density_pallas(pin_pos, netpin_start, flat_netpin, net_weights,
                       xl, xh, yl, yh, num_bins_x, num_bins_y,
                       initial_h=None, initial_v=None):
    """Returns (net_density_map, horizontal_map, vertical_map), all (nbx, nby) f32."""
    num_nets = int(net_weights.shape[0])
    num_entries = int(flat_netpin.shape[0])
    bsx = float(xh - xl) / num_bins_x
    bsy = float(yh - yl) / num_bins_y

    # ---- wrapper glue: per-net bbox + RUDY coefficients (segment reductions) ----
    flat_netpin = flat_netpin.astype(jnp.int32)
    px = pin_pos[2 * flat_netpin].astype(jnp.float32)
    py = pin_pos[2 * flat_netpin + 1].astype(jnp.float32)
    ent_net = (jnp.searchsorted(netpin_start.astype(jnp.int32),
                                jnp.arange(num_entries, dtype=jnp.int32),
                                side='right') - 1).astype(jnp.int32)

    xmin = jax.ops.segment_min(px, ent_net, num_segments=num_nets)
    xmax = jax.ops.segment_max(px, ent_net, num_segments=num_nets)
    ymin = jax.ops.segment_min(py, ent_net, num_segments=num_nets)
    ymax = jax.ops.segment_max(py, ent_net, num_segments=num_nets)
    cnt = jax.ops.segment_sum(jnp.ones_like(px), ent_net, num_segments=num_nets)
    has = cnt > 0
    zero = jnp.float32(0)
    xmin = jnp.where(has, xmin, zero)
    xmax = jnp.where(has, xmax, zero)
    ymin = jnp.where(has, ymin, zero)
    ymax = jnp.where(has, ymax, zero)
    bw = xmax - xmin
    bh = ymax - ymin
    area = jnp.maximum(bw * bh, jnp.float32(1e-4))
    w = net_weights.astype(jnp.float32)
    coeff_h = jnp.where(has, w * bw / area, zero)
    coeff_v = jnp.where(has, w * bh / area, zero)

    # ---- pad nets to NET_CHUNK and bins to lane/sublane-friendly sizes ----
    net_chunk = int(max(256, min(MAX_NET_CHUNK, _round_up(max(num_nets, 1), 256))))
    n_pad = _round_up(max(num_nets, 1), net_chunk)

    # x-oriented pack: nets on lanes (rows padded to 8 sublanes)
    xpack = jnp.zeros((8, n_pad), jnp.float32)
    xpack = (xpack.at[0, :num_nets].set(xmin)
                   .at[1, :num_nets].set(xmax)
                   .at[2, :num_nets].set(coeff_h)
                   .at[3, :num_nets].set(coeff_v))
    # y-oriented pack: nets on sublanes
    ypack = jnp.zeros((n_pad, 2), jnp.float32)
    ypack = ypack.at[:num_nets, 0].set(ymin).at[:num_nets, 1].set(ymax)

    nby_pad = max(128, _round_up(num_bins_y, 128))           # lane-dense output
    if num_bins_x <= MAX_X_TILE:
        x_tile = max(8, _round_up(num_bins_x, 8))
        nbx_pad = x_tile
    else:
        x_tile = MAX_X_TILE
        nbx_pad = _round_up(num_bins_x, MAX_X_TILE)

    # bin lower edges; padded bins lie past the layout -> zero overlap, sliced off
    bin_xl_arr = (xl + jnp.arange(nbx_pad, dtype=jnp.float32) * bsx).reshape(nbx_pad, 1)
    bin_yl_arr = (yl + jnp.arange(nby_pad, dtype=jnp.float32) * bsy).reshape(1, nby_pad)

    kernel = functools.partial(_net_density_kernel,
                               bin_size_x=bsx, bin_size_y=bsy)

    grid = (nbx_pad // x_tile, n_pad // net_chunk)   # (parallel bin tiles, net chunks)

    xpack_spec = pl.BlockSpec((8, net_chunk), lambda xt, c: (0, c))
    ypack_spec = pl.BlockSpec((net_chunk, 2), lambda xt, c: (c, 0))
    binx_spec = pl.BlockSpec((x_tile, 1), lambda xt, c: (xt, 0))
    biny_spec = pl.BlockSpec((1, nby_pad), lambda xt, c: (0, 0))
    map_spec = pl.BlockSpec((x_tile, nby_pad), lambda xt, c: (xt, 0))

    flops = 8 * n_pad * nbx_pad * nby_pad
    bytes_accessed = 4 * (xpack.size + ypack.size + bin_xl_arr.size
                          + bin_yl_arr.size + 2 * nbx_pad * nby_pad)
    cost = pl.CostEstimate(flops=int(flops), transcendentals=0,
                           bytes_accessed=int(bytes_accessed))

    h_pad, v_pad = pl.pallas_call(
        kernel,
        grid=grid,
        in_specs=[xpack_spec, ypack_spec, binx_spec, biny_spec],
        out_specs=[map_spec, map_spec],
        out_shape=[jax.ShapeDtypeStruct((nbx_pad, nby_pad), jnp.float32)] * 2,
        compiler_params=pltpu.CompilerParams(
            dimension_semantics=("parallel", "arbitrary"),
            vmem_limit_bytes=48 * 1024 * 1024),
        cost_estimate=cost,
    )(xpack, ypack, bin_xl_arr, bin_yl_arr)

    h = h_pad[:num_bins_x, :num_bins_y]
    v = v_pad[:num_bins_x, :num_bins_y]
    # torch semantics: add initial maps in place, then density = |H| + |V|
    if initial_h is not None:
        h = h + initial_h.astype(jnp.float32).reshape(num_bins_x, num_bins_y)
    if initial_v is not None:
        v = v + initial_v.astype(jnp.float32).reshape(num_bins_x, num_bins_y)
    d = jnp.abs(h) + jnp.abs(v)
    # torch return order: (net_density_map, horizontal_map, vertical_map)
    return d, h, v


def net_density_reference(pin_pos, netpin_start, flat_netpin, net_weights,
                          xl, xh, yl, yh, nbx, nby):
    """Pure-JAX f32 reference (broadcast-sum on the VPU, no MXU). Small shapes only."""
    num_nets = net_weights.shape[0]
    num_entries = flat_netpin.shape[0]
    bsx = (xh - xl) / nbx
    bsy = (yh - yl) / nby
    flat_netpin = flat_netpin.astype(jnp.int32)
    px = pin_pos[2 * flat_netpin].astype(jnp.float32)
    py = pin_pos[2 * flat_netpin + 1].astype(jnp.float32)
    ent_net = jnp.searchsorted(netpin_start.astype(jnp.int32),
                               jnp.arange(num_entries, dtype=jnp.int32),
                               side='right') - 1
    xmin = jax.ops.segment_min(px, ent_net, num_segments=num_nets)
    xmax = jax.ops.segment_max(px, ent_net, num_segments=num_nets)
    ymin = jax.ops.segment_min(py, ent_net, num_segments=num_nets)
    ymax = jax.ops.segment_max(py, ent_net, num_segments=num_nets)
    bw = xmax - xmin
    bh = ymax - ymin
    area = jnp.maximum(bw * bh, 1e-4)

    bin_xl = xl + jnp.arange(nbx, dtype=jnp.float32) * bsx
    bin_xh = bin_xl + bsx
    bin_yl = yl + jnp.arange(nby, dtype=jnp.float32) * bsy
    bin_yh = bin_yl + bsy
    ox = jnp.maximum(jnp.minimum(xmax[:, None], bin_xh[None, :]) -
                     jnp.maximum(xmin[:, None], bin_xl[None, :]), 0.0)  # (N, nbx)
    oy = jnp.maximum(jnp.minimum(ymax[:, None], bin_yh[None, :]) -
                     jnp.maximum(ymin[:, None], bin_yl[None, :]), 0.0)  # (N, nby)
    w = net_weights.astype(jnp.float32)
    prod = ox[:, :, None] * oy[:, None, :]                              # (N, nbx, nby)
    h = jnp.sum((w * bw / area)[:, None, None] * prod, axis=0)
    v = jnp.sum((w * bh / area)[:, None, None] * prod, axis=0)
    d = jnp.abs(h) + jnp.abs(v)
    return d, h, v


if __name__ == "__main__":
    key = jax.random.PRNGKey(0)
    num_nets = 150
    nbx = nby = 16
    xl, xh, yl, yh = 0.0, 16.0, 0.0, 16.0

    # deterministic net degrees in [2, 5]; each pin belongs to exactly one net
    degrees = 2 + (jnp.arange(num_nets, dtype=jnp.int32) % 4)
    num_pins = int(jnp.sum(degrees))                         # 523 pins
    netpin_start = jnp.concatenate(
        [jnp.zeros((1,), jnp.int32), jnp.cumsum(degrees).astype(jnp.int32)])

    k1, k2, k3 = jax.random.split(key, 3)
    flat_netpin = jax.random.permutation(k1, num_pins).astype(jnp.int32)
    pin_pos = jax.random.uniform(k2, (2 * num_pins,), jnp.float32,
                                 minval=xl, maxval=xh)       # xyxyxy...
    net_weights = jax.random.uniform(k3, (num_nets,), jnp.float32,
                                     minval=0.5, maxval=1.5)

    d, h, v = net_density_pallas(pin_pos, netpin_start, flat_netpin, net_weights,
                                 xl, xh, yl, yh, nbx, nby)
    jax.block_until_ready((d, h, v))

    d_r, h_r, v_r = net_density_reference(pin_pos, netpin_start, flat_netpin,
                                          net_weights, xl, xh, yl, yh, nbx, nby)
    # Kernel matmuls use DEFAULT MXU precision (single-pass bf16 for the f32
    # operands, <~0.8% worst-case on these nonnegative sums); tolerance set
    # accordingly per the perf review.
    assert bool(jnp.allclose(h, h_r, rtol=2e-2, atol=1e-2)), "horizontal map mismatch"
    assert bool(jnp.allclose(v, v_r, rtol=2e-2, atol=1e-2)), "vertical map mismatch"
    assert bool(jnp.allclose(d, d_r, rtol=2e-2, atol=1e-2)), "density map mismatch"
    print("KERNEL_OK")
</pallas_src>

<mosaic_0001>
module attributes {stable_mosaic.version = 11 : i64} {
  func.func @_net_density_kernel(%arg0: i32, %arg1: i32, %arg2: memref<8x256xf32, #tpu.memory_space<vmem>>, %arg3: memref<256x2xf32, #tpu.memory_space<vmem>>, %arg4: memref<16x1xf32, #tpu.memory_space<vmem>>, %arg5: memref<1x128xf32, #tpu.memory_space<vmem>>, %arg6: memref<16x128xf32, #tpu.memory_space<vmem>>, %arg7: memref<16x128xf32, #tpu.memory_space<vmem>>) attributes {dimension_semantics = [#tpu.dimension_semantics<parallel>, #tpu.dimension_semantics<arbitrary>], iteration_bounds = array<i64: 1, 1>, scalar_prefetch = 0 : i64, scratch_operands = 0 : i64, tpu.core_type = #tpu.core_type<tc>, window_params = [{transform_indices = @transform_0, window_bounds = array<i64: 8, 256>}, {transform_indices = @transform_1, window_bounds = array<i64: 256, 2>}, {transform_indices = @transform_2, window_bounds = array<i64: 16, 1>}, {pipeline_mode = #tpu.pipeline_mode<synchronous>, transform_indices = @transform_3, window_bounds = array<i64: 1, 128>}, {transform_indices = @transform_4, window_bounds = array<i64: 16, 128>}, {transform_indices = @transform_5, window_bounds = array<i64: 16, 128>}]} {
    %c0_i32 = arith.constant 0 : i32
    %0 = arith.cmpi eq, %arg1, %c0_i32 : i32
    %1 = arith.extui %0 : i1 to i32
    %c0_i32_0 = arith.constant 0 : i32
    %2 = arith.cmpi ne, %1, %c0_i32_0 : i32
    scf.if %2 {
      %cst_24 = arith.constant 0.000000e+00 : f32
      %46 = vector.broadcast %cst_24 : f32 to vector<16x128xf32>
      %c0_25 = arith.constant 0 : index
      %c0_26 = arith.constant 0 : index
      %47 = vector.load %arg6[%c0_25, %c0_26] : memref<16x128xf32, #tpu.memory_space<vmem>>, vector<16x128xf32>
      tpu.vector_store %arg6[%c0_25, %c0_26], %46 {strides = array<i32>} : memref<16x128xf32, #tpu.memory_space<vmem>>, vector<16x128xf32>,
      %cst_27 = arith.constant 0.000000e+00 : f32
      %48 = vector.broadcast %cst_27 : f32 to vector<16x128xf32>
      %c0_28 = arith.constant 0 : index
      %c0_29 = arith.constant 0 : index
      %49 = vector.load %arg7[%c0_28, %c0_29] : memref<16x128xf32, #tpu.memory_space<vmem>>, vector<16x128xf32>
      tpu.vector_store %arg7[%c0_28, %c0_29], %48 {strides = array<i32>} : memref<16x128xf32, #tpu.memory_space<vmem>>, vector<16x128xf32>,
    } else {
    }
    %c0 = arith.constant 0 : index
    %c0_1 = arith.constant 0 : index
    %3 = vector.load %arg2[%c0, %c0_1] : memref<8x256xf32, #tpu.memory_space<vmem>>, vector<1x256xf32>
    %c1 = arith.constant 1 : index
    %c0_2 = arith.constant 0 : index
    %4 = vector.load %arg2[%c1, %c0_2] : memref<8x256xf32, #tpu.memory_space<vmem>>, vector<1x256xf32>
    %c2 = arith.constant 2 : index
    %c0_3 = arith.constant 0 : index
    %5 = vector.load %arg2[%c2, %c0_3] : memref<8x256xf32, #tpu.memory_space<vmem>>, vector<1x256xf32>
    %c3 = arith.constant 3 : index
    %c0_4 = arith.constant 0 : index
    %6 = vector.load %arg2[%c3, %c0_4] : memref<8x256xf32, #tpu.memory_space<vmem>>, vector<1x256xf32>
    %c0_5 = arith.constant 0 : index
    %c0_6 = arith.constant 0 : index
    %7 = vector.load %arg3[%c0_5, %c0_6] : memref<256x2xf32, #tpu.memory_space<vmem>>, vector<256x2xf32>
    %8 = vector.extract_strided_slice %7 {offsets = [0, 0], sizes = [256, 1], strides = [1, 1]} : vector<256x2xf32> to vector<256x1xf32>
    %9 = vector.extract_strided_slice %7 {offsets = [0, 1], sizes = [256, 1], strides = [1, 1]} : vector<256x2xf32> to vector<256x1xf32>
    %c0_7 = arith.constant 0 : index
    %c0_8 = arith.constant 0 : index
    %10 = vector.load %arg4[%c0_7, %c0_8] : memref<16x1xf32, #tpu.memory_space<vmem>>, vector<16x1xf32>
    %cst = arith.constant 1.000000e+00 : f32
    %11 = vector.broadcast %cst : f32 to vector<16x1xf32>
    %12 = arith.addf %10, %11 : vector<16x1xf32>
    %c0_9 = arith.constant 0 : index
    %c0_10 = arith.constant 0 : index
    %13 = vector.load %arg5[%c0_9, %c0_10] : memref<1x128xf32, #tpu.memory_space<vmem>>, vector<1x128xf32>
    %cst_11 = arith.constant 1.000000e+00 : f32
    %14 = vector.broadcast %cst_11 : f32 to vector<1x128xf32>
    %15 = arith.addf %13, %14 : vector<1x128xf32>
    %16 = vector.broadcast %4 : vector<1x256xf32> to vector<16x256xf32>
    %17 = vector.broadcast %12 : vector<16x1xf32> to vector<16x256xf32>
    %18 = arith.minimumf %16, %17 : vector<16x256xf32>
    %19 = vector.broadcast %3 : vector<1x256xf32> to vector<16x256xf32>
    %20 = vector.broadcast %10 : vector<16x1xf32> to vector<16x256xf32>
    %21 = arith.maximumf %19, %20 : vector<16x256xf32>
    %22 = arith.subf %18, %21 : vector<16x256xf32>
    %cst_12 = arith.constant 0.000000e+00 : f32
    %23 = vector.broadcast %cst_12 : f32 to vector<16x256xf32>
    %24 = arith.maximumf %22, %23 : vector<16x256xf32>
    %25 = vector.broadcast %9 : vector<256x1xf32> to vector<256x128xf32>
    %26 = vector.broadcast %15 : vector<1x128xf32> to vector<256x128xf32>
    %27 = arith.minimumf %25, %26 : vector<256x128xf32>
    %28 = vector.broadcast %8 : vector<256x1xf32> to vector<256x128xf32>
    %29 = vector.broadcast %13 : vector<1x128xf32> to vector<256x128xf32>
    %30 = arith.maximumf %28, %29 : vector<256x128xf32>
    %31 = arith.subf %27, %30 : vector<256x128xf32>
    %cst_13 = arith.constant 0.000000e+00 : f32
    %32 = vector.broadcast %cst_13 : f32 to vector<256x128xf32>
    %33 = arith.maximumf %31, %32 : vector<256x128xf32>
    %c0_14 = arith.constant 0 : index
    %c0_15 = arith.constant 0 : index
    %34 = vector.load %arg6[%c0_14, %c0_15] : memref<16x128xf32, #tpu.memory_space<vmem>>, vector<16x128xf32>
    %35 = vector.broadcast %5 : vector<1x256xf32> to vector<16x256xf32>
    %36 = arith.mulf %24, %35 : vector<16x256xf32>
    %cst_16 = arith.constant dense<0.000000e+00> : vector<16x128xf32>
    %37 = tpu.matmul %36, %33, %cst_16 {dimension_numbers = #tpu.dot_dimension_numbers<[1], [0], [0], [1], [0, 0, 1, 1], [], []>} : vector<16x256xf32>, vector<256x128xf32>, vector<16x128xf32> -> vector<16x128xf32>
    %38 = arith.addf %34, %37 : vector<16x128xf32>
    %c0_17 = arith.constant 0 : index
    %c0_18 = arith.constant 0 : index
    %39 = vector.load %arg6[%c0_17, %c0_18] : memref<16x128xf32, #tpu.memory_space<vmem>>, vector<16x128xf32>
    tpu.vector_store %arg6[%c0_17, %c0_18], %38 {strides = array<i32>} : memref<16x128xf32, #tpu.memory_space<vmem>>, vector<16x128xf32>,
    %c0_19 = arith.constant 0 : index
    %c0_20 = arith.constant 0 : index
    %40 = vector.load %arg7[%c0_19, %c0_20] : memref<16x128xf32, #tpu.memory_space<vmem>>, vector<16x128xf32>
    %41 = vector.broadcast %6 : vector<1x256xf32> to vector<16x256xf32>
    %42 = arith.mulf %24, %41 : vector<16x256xf32>
    %cst_21 = arith.constant dense<0.000000e+00> : vector<16x128xf32>
    %43 = tpu.matmul %42, %33, %cst_21 {dimension_numbers = #tpu.dot_dimension_numbers<[1], [0], [0], [1], [0, 0, 1, 1], [], []>} : vector<16x256xf32>, vector<256x128xf32>, vector<16x128xf32> -> vector<16x128xf32>
    %44 = arith.addf %40, %43 : vector<16x128xf32>
    %c0_22 = arith.constant 0 : index
    %c0_23 = arith.constant 0 : index
    %45 = vector.load %arg7[%c0_22, %c0_23] : memref<16x128xf32, #tpu.memory_space<vmem>>, vector<16x128xf32>
    tpu.vector_store %arg7[%c0_22, %c0_23], %44 {strides = array<i32>} : memref<16x128xf32, #tpu.memory_space<vmem>>, vector<16x128xf32>,
    return
  }
  func.func @transform_0(%arg0: i32, %arg1: i32) -> (i32, i32) {
    %c0_i32 = arith.constant 0 : i32
    %c0_i32_0 = arith.constant 0 : i32
    return %c0_i32, %arg1 : i32, i32
  }
  func.func @transform_1(%arg0: i32, %arg1: i32) -> (i32, i32) {
    %c0_i32 = arith.constant 0 : i32
    %c0_i32_0 = arith.constant 0 : i32
    return %arg1, %c0_i32 : i32, i32
  }
  func.func @transform_2(%arg0: i32, %arg1: i32) -> (i32, i32) {
    %c0_i32 = arith.constant 0 : i32
    %c0_i32_0 = arith.constant 0 : i32
    return %arg0, %c0_i32 : i32, i32
  }
  func.func @transform_3(%arg0: i32, %arg1: i32) -> (i32, i32) {
    %c0_i32 = arith.constant 0 : i32
    %c0_i32_0 = arith.constant 0 : i32
    %c0_i32_1 = arith.constant 0 : i32
    return %c0_i32, %c0_i32_0 : i32, i32
  }
  func.func @transform_4(%arg0: i32, %arg1: i32) -> (i32, i32) {
    %c0_i32 = arith.constant 0 : i32
    %c0_i32_0 = arith.constant 0 : i32
    return %arg0, %c0_i32 : i32, i32
  }
  func.func @transform_5(%arg0: i32, %arg1: i32) -> (i32, i32) {
    %c0_i32 = arith.constant 0 : i32
    %c0_i32_0 = arith.constant 0 : i32
    return %arg0, %c0_i32 : i32, i32
  }
}

</mosaic_0001>

<llo_original>
// kernel: tpu_custom_call.1
$region0: #{tpu_custom_call.1}
  #allocation0 [shape = 'u32[]', space=smem, size = 0x4, offset = 0x4, fixed_abs, tag = 'smem constant byte address 0x4 - core index']
  #allocation1 [shape = 'u32[72,128]{1,0:T(1,128)}', space=vmem, size = 0x9000, scoped, tag = 'internal scratch']
  %s0 = inlined_call_operand.vmem [shape: f32[8,256], index: 0, kind: input, shape index: {}]
  %s1 = inlined_call_operand.vmem [shape: f32[256,2], index: 1, kind: input, shape index: {}]
  %s2 = inlined_call_operand.vmem [shape: f32[16,1], index: 2, kind: input, shape index: {}]
  %s3 = inlined_call_operand.vmem [shape: f32[1,128], index: 3, kind: input, shape index: {}]
  %s4 = inlined_call_operand.hbm [shape: f32[16,128], index: 4, kind: output, shape index: {0}]
  %s5 = inlined_call_operand.hbm [shape: f32[16,128], index: 5, kind: output, shape index: {1}]
  %6 = xla_tuple %s4, %s5
  %s7 = sld [smem:[#allocation0]]
  $region38: #{tpu_custom_call.1} parent=0
    _
  %s9 = ssub.s32 1, %s7
  %s10 = scalar_select 0, %s9, %s7
  $region1: #{tpu_custom_call.1} parent=0
    #allocation2 [shape = 'u8[8192]{0}', space=vmem, size = 0x2000, scoped, tag = 'output window, operand 0, single buffered']
    #allocation3 [shape = 's32[1]{0}', space=sflag, size = 0x4, scoped, tag = 'scoped memory for tpu_custom_call.1']
    #allocation4 [shape = 'u8[8192]{0}', space=vmem, size = 0x2000, scoped, tag = 'output window, operand 1, single buffered']
    #allocation5 [shape = 's32[1]{0}', space=sflag, size = 0x4, scoped, tag = 'scoped memory for tpu_custom_call.1']
    %11 = vsyncpa [#allocation3], 0
    %12 = vsyncpa [#allocation5], 0
    // Predicated region
    $region2: #{tpu_custom_call.1} parent=1 // pred_check
      _
    $region3: #{tpu_custom_call.1} parent=1 // pred_check_branch
      %14 = sbr.rel (0) target = $region5
    $region4: #{tpu_custom_call.1} parent=1 // pred_region
      _
    $region5: #{tpu_custom_call.1} parent=1 // pred_fallthru
      _
    // Predicated region
    $region6: #{tpu_custom_call.1} parent=1 // pred_check
      _
    $region7: #{tpu_custom_call.1} parent=1 // pred_check_branch
      %16 = sbr.rel (0) target = $region9
    $region8: #{tpu_custom_call.1} parent=1 // pred_region
      _
    $region9: #{tpu_custom_call.1} parent=1 // pred_fallthru
      _
    // Predicated region
    $region10: #{tpu_custom_call.1} parent=1 // pred_check
      _
    $region11: #{tpu_custom_call.1} parent=1 // pred_check_branch
      %18 = sbr.rel (0) target = $region13
    $region12: #{tpu_custom_call.1} parent=1 // pred_region
      _
    $region13: #{tpu_custom_call.1} parent=1 // pred_fallthru
      _
    // Predicated region
    $region14: #{tpu_custom_call.1} parent=1 // pred_check
      _
    $region15: #{tpu_custom_call.1} parent=1 // pred_check_branch
      %20 = sbr.rel (0) target = $region17
    $region16: #{tpu_custom_call.1} parent=1 // pred_region
      _
    $region17: #{tpu_custom_call.1} parent=1 // pred_fallthru
      _
    %p21 = scmp.eq.s32.totalorder 0, 0
    // Predicated region
    $region18: #{tpu_custom_call.1} parent=1 // pred_check
      %p22 = pneg %p21
    $region19: #{tpu_custom_call.1} parent=1 // pred_check_branch
      %24 = sbr.rel (%p22) target = $region21
    $region20: #{tpu_custom_call.1} parent=1 // pred_region
      %25 = vst [vmem:[#allocation2] sm:$0xff] 0.0
      %26 = vst [vmem:[#allocation2 + $0x8] sm:$0xff] 0.0
      %27 = vst [vmem:[#allocation4] sm:$0xff] 0.0
      %28 = vst [vmem:[#allocation4 + $0x8] sm:$0xff] 0.0
    $region21: #{tpu_custom_call.1} parent=1 // pred_fallthru
      _
    %v29 = vld [vmem:[%s0] ss:$8 sm:$0x3]
    %s30 = scalar_lea.vmem %s0, 1
    %v31 = vld [vmem:[%s30] ss:$8 sm:$0x3]
    %s32 = scalar_lea.vmem %s0, 2
    %v33 = vld [vmem:[%s32] ss:$8 sm:$0x3]
    %s34 = scalar_lea.vmem %s0, 3
    %v35 = vld [vmem:[%s34] ss:$8 sm:$0x3]
    %v36 = vld [vmem:[%s1] sm:$0xff]
    %v37 = vld [vmem:[%s1 + $0x8] sm:$0xff]
    %v38 = vld [vmem:[%s1 + $0x10] sm:$0xff]
    %v39 = vld [vmem:[%s1 + $0x18] sm:$0xff]
    %v40 = vld [vmem:[%s1 + $0x20] sm:$0xff]
    %v41 = vld [vmem:[%s1 + $0x28] sm:$0xff]
    %v42 = vld [vmem:[%s1 + $0x30] sm:$0xff]
    %v43 = vld [vmem:[%s1 + $0x38] sm:$0xff]
    %v44 = vld [vmem:[%s1 + $0x40] sm:$0xff]
    %v45 = vld [vmem:[%s1 + $0x48] sm:$0xff]
    %v46 = vld [vmem:[%s1 + $0x50] sm:$0xff]
    %v47 = vld [vmem:[%s1 + $0x58] sm:$0xff]
    %v48 = vld [vmem:[%s1 + $0x60] sm:$0xff]
    %v49 = vld [vmem:[%s1 + $0x68] sm:$0xff]
    %v50 = vld [vmem:[%s1 + $0x70] sm:$0xff]
    %v51 = vld [vmem:[%s1 + $0x78] sm:$0xff]
    %v52 = vld [vmem:[%s1 + $0x80] sm:$0xff]
    %v53 = vld [vmem:[%s1 + $0x88] sm:$0xff]
    %v54 = vld [vmem:[%s1 + $0x90] sm:$0xff]
    %v55 = vld [vmem:[%s1 + $0x98] sm:$0xff]
    %v56 = vld [vmem:[%s1 + $0xa0] sm:$0xff]
    %v57 = vld [vmem:[%s1 + $0xa8] sm:$0xff]
    %v58 = vld [vmem:[%s1 + $0xb0] sm:$0xff]
    %v59 = vld [vmem:[%s1 + $0xb8] sm:$0xff]
    %v60 = vld [vmem:[%s1 + $0xc0] sm:$0xff]
    %v61 = vld [vmem:[%s1 + $0xc8] sm:$0xff]
    %v62 = vld [vmem:[%s1 + $0xd0] sm:$0xff]
    %v63 = vld [vmem:[%s1 + $0xd8] sm:$0xff]
    %v64 = vld [vmem:[%s1 + $0xe0] sm:$0xff]
    %v65 = vld [vmem:[%s1 + $0xe8] sm:$0xff]
    %v66 = vld [vmem:[%s1 + $0xf0] sm:$0xff]
    %v67 = vld [vmem:[%s1 + $0xf8] sm:$0xff]
    %v68 = vld [vmem:[%s2] sm:$0xff]
    %v69 = vld [vmem:[%s2 + $0x8] sm:$0xff]
    %v70 = vadd.f32 %v68, 1.0
    %v71 = vadd.f32 %v69, 1.0
    %v72 = vld [vmem:[%s3] sm:$0x1]
    %v73 = vadd.f32 %v72, 1.0
    %v75 = vperm.slane %v31, 0
    %v76 = vperm.slane %v31, 1
    %80 = vset.pattern.permute.xlu0 0
    %81 = vperm.xlu0 %80, %v70
    %v82 = vpop.permute.xlu0 %81
    %85 = vset.pattern.permute.xlu0 0
    %86 = vperm.xlu0 %85, %v71
    %v87 = vpop.permute.xlu0 %86
    %v89 = vmin.f32 %v75, %v82
    %v90 = vmin.f32 %v76, %v82
    %v91 = vmin.f32 %v75, %v87
    %v92 = vmin.f32 %v76, %v87
    %v94 = vperm.slane %v29, 0
    %v95 = vperm.slane %v29, 1
    %99 = vset.pattern.permute.xlu0 0
    %100 = vperm.xlu0 %99, %v68
    %v101 = vpop.permute.xlu0 %100
    %104 = vset.pattern.permute.xlu0 0
    %105 = vperm.xlu0 %104, %v69
    %v106 = vpop.permute.xlu0 %105
    %v108 = vmax.f32 %v94, %v101
    %v109 = vmax.f32 %v95, %v101
    %v110 = vmax.f32 %v94, %v106
    %v111 = vmax.f32 %v95, %v106
    %v112 = vsub.f32 %v89, %v108
    %v113 = vsub.f32 %v90, %v109
    %v114 = vsub.f32 %v91, %v110
    %v115 = vsub.f32 %v92, %v111
    %v116 = vmax.f32 %v112, 0.0
    %v117 = vmax.f32 %v113, 0.0
    %v118 = vmax.f32 %v114, 0.0
    %v119 = vmax.f32 %v115, 0.0
    %121 = vset.pattern.permute.xlu0 1
    %122 = vperm.xlu0 %121, %v36
    %v123 = vpop.permute.xlu0 %122
    %126 = vset.pattern.permute.xlu0 1
    %127 = vperm.xlu0 %126, %v37
    %v128 = vpop.permute.xlu0 %127
    %131 = vset.pattern.permute.xlu0 1
    %132 = vperm.xlu0 %131, %v38
    %v133 = vpop.permute.xlu0 %132
    %136 = vset.pattern.permute.xlu0 1
    %137 = vperm.xlu0 %136, %v39
    %v138 = vpop.permute.xlu0 %137
    %141 = vset.pattern.permute.xlu0 1
    %142 = vperm.xlu0 %141, %v40
    %v143 = vpop.permute.xlu0 %142
    %146 = vset.pattern.permute.xlu0 1
    %147 = vperm.xlu0 %146, %v41
    %v148 = vpop.permute.xlu0 %147
    %151 = vset.pattern.permute.xlu0 1
    %152 = vperm.xlu0 %151, %v42
    %v153 = vpop.permute.xlu0 %152
    %156 = vset.pattern.permute.xlu0 1
    %157 = vperm.xlu0 %156, %v43
    %v158 = vpop.permute.xlu0 %157
    %161 = vset.pattern.permute.xlu0 1
    %162 = vperm.xlu0 %161, %v44
    %v163 = vpop.permute.xlu0 %162
    %166 = vset.pattern.permute.xlu0 1
    %167 = vperm.xlu0 %166, %v45
    %v168 = vpop.permute.xlu0 %167
    %171 = vset.pattern.permute.xlu0 1
    %172 = vperm.xlu0 %171, %v46
    %v173 = vpop.permute.xlu0 %172
    %176 = vset.pattern.permute.xlu0 1
    %177 = vperm.xlu0 %176, %v47
    %v178 = vpop.permute.xlu0 %177
    %181 = vset.pattern.permute.xlu0 1
    %182 = vperm.xlu0 %181, %v48
    %v183 = vpop.permute.xlu0 %182
    %186 = vset.pattern.permute.xlu0 1
    %187 = vperm.xlu0 %186, %v49
    %v188 = vpop.permute.xlu0 %187
    %191 = vset.pattern.permute.xlu0 1
    %192 = vperm.xlu0 %191, %v50
    %v193 = vpop.permute.xlu0 %192
    %196 = vset.pattern.permute.xlu0 1
    %197 = vperm.xlu0 %196, %v51
    %v198 = vpop.permute.xlu0 %197
    %201 = vset.pattern.permute.xlu0 1
    %202 = vperm.xlu0 %201, %v52
    %v203 = vpop.permute.xlu0 %202
    %206 = vset.pattern.permute.xlu0 1
    %207 = vperm.xlu0 %206, %v53
    %v208 = vpop.permute.xlu0 %207
    %211 = vset.pattern.permute.xlu0 1
    %212 = vperm.xlu0 %211, %v54
    %v213 = vpop.permute.xlu0 %212
    %216 = vset.pattern.permute.xlu0 1
    %217 = vperm.xlu0 %216, %v55
    %v218 = vpop.permute.xlu0 %217
    %221 = vset.pattern.permute.xlu0 1
    %222 = vperm.xlu0 %221, %v56
    %v223 = vpop.permute.xlu0 %222
    %226 = vset.pattern.permute.xlu0 1
    %227 = vperm.xlu0 %226, %v57
    %v228 = vpop.permute.xlu0 %227
    %231 = vset.pattern.permute.xlu0 1
    %232 = vperm.xlu0 %231, %v58
    %v233 = vpop.permute.xlu0 %232
    %236 = vset.pattern.permute.xlu0 1
    %237 = vperm.xlu0 %236, %v59
    %v238 = vpop.permute.xlu0 %237
    %241 = vset.pattern.permute.xlu0 1
    %242 = vperm.xlu0 %241, %v60
    %v243 = vpop.permute.xlu0 %242
    %246 = vset.pattern.permute.xlu0 1
    %247 = vperm.xlu0 %246, %v61
    %v248 = vpop.permute.xlu0 %247
    %251 = vset.pattern.permute.xlu0 1
    %252 = vperm.xlu0 %251, %v62
    %v253 = vpop.permute.xlu0 %252
    %256 = vset.pattern.permute.xlu0 1
    %257 = vperm.xlu0 %256, %v63
    %v258 = vpop.permute.xlu0 %257
    %261 = vset.pattern.permute.xlu0 1
    %262 = vperm.xlu0 %261, %v64
    %v263 = vpop.permute.xlu0 %262
    %266 = vset.pattern.permute.xlu0 1
    %267 = vperm.xlu0 %266, %v65
    %v268 = vpop.permute.xlu0 %267
    %271 = vset.pattern.permute.xlu0 1
    %272 = vperm.xlu0 %271, %v66
    %v273 = vpop.permute.xlu0 %272
    %276 = vset.pattern.permute.xlu0 1
    %277 = vperm.xlu0 %276, %v67
    %v278 = vpop.permute.xlu0 %277
    %v281 = vperm.slane %v73, 0
    %v283 = vmin.f32 %v123, %v281
    %v284 = vmin.f32 %v128, %v281
    %v285 = vmin.f32 %v133, %v281
    %v286 = vmin.f32 %v138, %v281
    %v287 = vmin.f32 %v143, %v281
    %v288 = vmin.f32 %v148, %v281
    %v289 = vmin.f32 %v153, %v281
    %v290 = vmin.f32 %v158, %v281
    %v291 = vmin.f32 %v163, %v281
    %v292 = vmin.f32 %v168, %v281
    %v293 = vmin.f32 %v173, %v281
    %v294 = vmin.f32 %v178, %v281
    %v295 = vmin.f32 %v183, %v281
    %v296 = vmin.f32 %v188, %v281
    %v297 = vmin.f32 %v193, %v281
    %v298 = vmin.f32 %v198, %v281
    %v299 = vmin.f32 %v203, %v281
    %v300 = vmin.f32 %v208, %v281
    %v301 = vmin.f32 %v213, %v281
    %v302 = vmin.f32 %v218, %v281
    %v303 = vmin.f32 %v223, %v281
    %v304 = vmin.f32 %v228, %v281
    %v305 = vmin.f32 %v233, %v281
    %v306 = vmin.f32 %v238, %v281
    %v307 = vmin.f32 %v243, %v281
    %v308 = vmin.f32 %v248, %v281
    %v309 = vmin.f32 %v253, %v281
    %v310 = vmin.f32 %v258, %v281
    %v311 = vmin.f32 %v263, %v281
    %v312 = vmin.f32 %v268, %v281
    %v313 = vmin.f32 %v273, %v281
    %v314 = vmin.f32 %v278, %v281
    %315 = vset.pattern.permute.xlu0 0
    %316 = vperm.xlu0 %315, %v36
    %v317 = vpop.permute.xlu0 %316
    %319 = vset.pattern.permute.xlu0 0
    %320 = vperm.xlu0 %319, %v37
    %v321 = vpop.permute.xlu0 %320
    %323 = vset.pattern.permute.xlu0 0
    %324 = vperm.xlu0 %323, %v38
    %v325 = vpop.permute.xlu0 %324
    %327 = vset.pattern.permute.xlu0 0
    %328 = vperm.xlu0 %327, %v39
    %v329 = vpop.permute.xlu0 %328
    %331 = vset.pattern.permute.xlu0 0
    %332 = vperm.xlu0 %331, %v40
    %v333 = vpop.permute.xlu0 %332
    %335 = vset.pattern.permute.xlu0 0
    %336 = vperm.xlu0 %335, %v41
    %v337 = vpop.permute.xlu0 %336
    %339 = vset.pattern.permute.xlu0 0
    %340 = vperm.xlu0 %339, %v42
    %v341 = vpop.permute.xlu0 %340
    %343 = vset.pattern.permute.xlu0 0
    %344 = vperm.xlu0 %343, %v43
    %v345 = vpop.permute.xlu0 %344
    %347 = vset.pattern.permute.xlu0 0
    %348 = vperm.xlu0 %347, %v44
    %v349 = vpop.permute.xlu0 %348
    %351 = vset.pattern.permute.xlu0 0
    %352 = vperm.xlu0 %351, %v45
    %v353 = vpop.permute.xlu0 %352
    %355 = vset.pattern.permute.xlu0 0
    %356 = vperm.xlu0 %355, %v46
    %v357 = vpop.permute.xlu0 %356
    %359 = vset.pattern.permute.xlu0 0
    %360 = vperm.xlu0 %359, %v47
    %v361 = vpop.permute.xlu0 %360
    %363 = vset.pattern.permute.xlu0 0
    %364 = vperm.xlu0 %363, %v48
    %v365 = vpop.permute.xlu0 %364
    %367 = vset.pattern.permute.xlu0 0
    %368 = vperm.xlu0 %367, %v49
    %v369 = vpop.permute.xlu0 %368
    %371 = vset.pattern.permute.xlu0 0
    %372 = vperm.xlu0 %371, %v50
    %v373 = vpop.permute.xlu0 %372
    %375 = vset.pattern.permute.xlu0 0
    %376 = vperm.xlu0 %375, %v51
    %v377 = vpop.permute.xlu0 %376
    %379 = vset.pattern.permute.xlu0 0
    %380 = vperm.xlu0 %379, %v52
    %v381 = vpop.permute.xlu0 %380
    %383 = vset.pattern.permute.xlu0 0
    %384 = vperm.xlu0 %383, %v53
    %v385 = vpop.permute.xlu0 %384
    %387 = vset.pattern.permute.xlu0 0
    %388 = vperm.xlu0 %387, %v54
    %v389 = vpop.permute.xlu0 %388
    %391 = vset.pattern.permute.xlu0 0
    %392 = vperm.xlu0 %391, %v55
    %v393 = vpop.permute.xlu0 %392
    %395 = vset.pattern.permute.xlu0 0
    %396 = vperm.xlu0 %395, %v56
    %v397 = vpop.permute.xlu0 %396
    %399 = vset.pattern.permute.xlu0 0
    %400 = vperm.xlu0 %399, %v57
    %v401 = vpop.permute.xlu0 %400
    %403 = vset.pattern.permute.xlu0 0
    %404 = vperm.xlu0 %403, %v58
    %v405 = vpop.permute.xlu0 %404
    %407 = vset.pattern.permute.xlu0 0
    %408 = vperm.xlu0 %407, %v59
    %v409 = vpop.permute.xlu0 %408
    %411 = vset.pattern.permute.xlu0 0
    %412 = vperm.xlu0 %411, %v60
    %v413 = vpop.permute.xlu0 %412
    %415 = vset.pattern.permute.xlu0 0
    %416 = vperm.xlu0 %415, %v61
    %v417 = vpop.permute.xlu0 %416
    %419 = vset.pattern.permute.xlu0 0
    %420 = vperm.xlu0 %419, %v62
    %v421 = vpop.permute.xlu0 %420
    %423 = vset.pattern.permute.xlu0 0
    %424 = vperm.xlu0 %423, %v63
    %v425 = vpop.permute.xlu0 %424
    %427 = vset.pattern.permute.xlu0 0
    %428 = vperm.xlu0 %427, %v64
    %v429 = vpop.permute.xlu0 %428
    %431 = vset.pattern.permute.xlu0 0
    %432 = vperm.xlu0 %431, %v65
    %v433 = vpop.permute.xlu0 %432
    %435 = vset.pattern.permute.xlu0 0
    %436 = vperm.xlu0 %435, %v66
    %v437 = vpop.permute.xlu0 %436
    %439 = vset.pattern.permute.xlu0 0
    %440 = vperm.xlu0 %439, %v67
    %v441 = vpop.permute.xlu0 %440
    %v444 = vperm.slane %v72, 0
    %v446 = vmax.f32 %v317, %v444
    %v447 = vmax.f32 %v321, %v444
    %v448 = vmax.f32 %v325, %v444
    %v449 = vmax.f32 %v329, %v444
    %v450 = vmax.f32 %v333, %v444
    %v451 = vmax.f32 %v337, %v444
    %v452 = vmax.f32 %v341, %v444
    %v453 = vmax.f32 %v345, %v444
    %v454 = vmax.f32 %v349, %v444
    %v455 = vmax.f32 %v353, %v444
    %v456 = vmax.f32 %v357, %v444
    %v457 = vmax.f32 %v361, %v444
    %v458 = vmax.f32 %v365, %v444
    %v459 = vmax.f32 %v369, %v444
    %v460 = vmax.f32 %v373, %v444
    %v461 = vmax.f32 %v377, %v444
    %v462 = vmax.f32 %v381, %v444
    %v463 = vmax.f32 %v385, %v444
    %v464 = vmax.f32 %v389, %v444
    %v465 = vmax.f32 %v393, %v444
    %v466 = vmax.f32 %v397, %v444
    %v467 = vmax.f32 %v401, %v444
    %v468 = vmax.f32 %v405, %v444
    %v469 = vmax.f32 %v409, %v444
    %v470 = vmax.f32 %v413, %v444
    %v471 = vmax.f32 %v417, %v444
    %v472 = vmax.f32 %v421, %v444
    %v473 = vmax.f32 %v425, %v444
    %v474 = vmax.f32 %v429, %v444
    %v475 = vmax.f32 %v433, %v444
    %v476 = vmax.f32 %v437, %v444
    %v477 = vmax.f32 %v441, %v444
    %v478 = vsub.f32 %v283, %v446
    %v479 = vsub.f32 %v284, %v447
    %v480 = vsub.f32 %v285, %v448
    %v481 = vsub.f32 %v286, %v449
    %v482 = vsub.f32 %v287, %v450
    %v483 = vsub.f32 %v288, %v451
    %v484 = vsub.f32 %v289, %v452
    %v485 = vsub.f32 %v290, %v453
    %v486 = vsub.f32 %v291, %v454
    %v487 = vsub.f32 %v292, %v455
    %v488 = vsub.f32 %v293, %v456
    %v489 = vsub.f32 %v294, %v457
    %v490 = vsub.f32 %v295, %v458
    %v491 = vsub.f32 %v296, %v459
    %v492 = vsub.f32 %v297, %v460
    %v493 = vsub.f32 %v298, %v461
    %v494 = vsub.f32 %v299, %v462
    %v495 = vsub.f32 %v300, %v463
    %v496 = vsub.f32 %v301, %v464
    %v497 = vsub.f32 %v302, %v465
    %v498 = vsub.f32 %v303, %v466
    %v499 = vsub.f32 %v304, %v467
    %v500 = vsub.f32 %v305, %v468
    %v501 = vsub.f32 %v306, %v469
    %v502 = vsub.f32 %v307, %v470
    %v503 = vsub.f32 %v308, %v471
    %v504 = vsub.f32 %v309, %v472
    %v505 = vsub.f32 %v310, %v473
    %v506 = vsub.f32 %v311, %v474
    %v507 = vsub.f32 %v312, %v475
    %v508 = vsub.f32 %v313, %v476
    %v509 = vsub.f32 %v314, %v477
    %v510 = vmax.f32 %v478, 0.0
    %v511 = vmax.f32 %v479, 0.0
    %v512 = vmax.f32 %v480, 0.0
    %v513 = vmax.f32 %v481, 0.0
    %v514 = vmax.f32 %v482, 0.0
    %v515 = vmax.f32 %v483, 0.0
    %v516 = vmax.f32 %v484, 0.0
    %v517 = vmax.f32 %v485, 0.0
    %v518 = vmax.f32 %v486, 0.0
    %v519 = vmax.f32 %v487, 0.0
    %v520 = vmax.f32 %v488, 0.0
    %v521 = vmax.f32 %v489, 0.0
    %v522 = vmax.f32 %v490, 0.0
    %v523 = vmax.f32 %v491, 0.0
    %v524 = vmax.f32 %v492, 0.0
    %v525 = vmax.f32 %v493, 0.0
    %v526 = vmax.f32 %v494, 0.0
    %v527 = vmax.f32 %v495, 0.0
    %v528 = vmax.f32 %v496, 0.0
    %v529 = vmax.f32 %v497, 0.0
    %v530 = vmax.f32 %v498, 0.0
    %v531 = vmax.f32 %v499, 0.0
    %v532 = vmax.f32 %v500, 0.0
    %v533 = vmax.f32 %v501, 0.0
    %v534 = vmax.f32 %v502, 0.0
    %v535 = vmax.f32 %v503, 0.0
    %v536 = vmax.f32 %v504, 0.0
    %v537 = vmax.f32 %v505, 0.0
    %v538 = vmax.f32 %v506, 0.0
    %v539 = vmax.f32 %v507, 0.0
    %v540 = vmax.f32 %v508, 0.0
    %v541 = vmax.f32 %v509, 0.0
    %v542 = vld [vmem:[#allocation2] sm:$0xff]
    %v543 = vld [vmem:[#allocation2 + $0x8] sm:$0xff]
    %v545 = vperm.slane %v33, 0
    %v546 = vperm.slane %v33, 1
    %v549 = vmul.f32 %v116, %v545
    %v550 = vmul.f32 %v117, %v546
    %v551 = vmul.f32 %v118, %v545
    %v552 = vmul.f32 %v119, %v546
    %553 = vmatpush.msra.mxu0 %v525
    %554 = vmatpush.msra.mxu0 %v524
    %555 = vmatpush.msra.mxu0 %v523
    %556 = vmatpush.msra.mxu0 %v522
    %557 = vmatpush.msra.mxu0 %v521
    %558 = vmatpush.msra.mxu0 %v520
    %559 = vmatpush.msra.mxu0 %v519
    %560 = vmatpush.msra.mxu0 %v518
    %561 = vmatpush.msra.mxu0 %v517
    %562 = vmatpush.msra.mxu0 %v516
    %563 = vmatpush.msra.mxu0 %v515
    %564 = vmatpush.msra.mxu0 %v514
    %565 = vmatpush.msra.mxu0 %v513
    %566 = vmatpush.msra.mxu0 %v512
    %567 = vmatpush.msra.mxu0 %v511
    %568 = vmatpush.msra.mxu0 %v510
    %569 = vmatmul.f32.gmra.mxu0 %v549
    %v570 = vpop.f32.mrf.mxu0
    %v571 = vadd.f32 0.0, %v570
    %572 = vmatmul.f32.gmra.mxu0 %v551
    %v573 = vpop.f32.mrf.mxu0
    %v574 = vadd.f32 0.0, %v573
    %575 = vdwg.mxu0
    %576 = vmatpush.msra.mxu0 %v541
    %577 = vmatpush.msra.mxu0 %v540
    %578 = vmatpush.msra.mxu0 %v539
    %579 = vmatpush.msra.mxu0 %v538
    %580 = vmatpush.msra.mxu0 %v537
    %581 = vmatpush.msra.mxu0 %v536
    %582 = vmatpush.msra.mxu0 %v535
    %583 = vmatpush.msra.mxu0 %v534
    %584 = vmatpush.msra.mxu0 %v533
    %585 = vmatpush.msra.mxu0 %v532
    %586 = vmatpush.msra.mxu0 %v531
    %587 = vmatpush.msra.mxu0 %v530
    %588 = vmatpush.msra.mxu0 %v529
    %589 = vmatpush.msra.mxu0 %v528
    %590 = vmatpush.msra.mxu0 %v527
    %591 = vmatpush.msra.mxu0 %v526
    %592 = vmatmul.f32.gmra.mxu0 %v550
    %v593 = vpop.f32.mrf.mxu0
    %v594 = vadd.f32 %v571, %v593
    %595 = vmatmul.f32.gmra.mxu0 %v552
    %v596 = vpop.f32.mrf.mxu0
    %v597 = vadd.f32 %v574, %v596
    %598 = vdwg.mxu0
    %v599 = vadd.f32 %v542, %v594
    %v600 = vadd.f32 %v543, %v597
    %601 = vst [vmem:[#allocation2] sm:$0xff] %v599
    %602 = vst [vmem:[#allocation2 + $0x8] sm:$0xff] %v600
    %v603 = vld [vmem:[#allocation4] sm:$0xff]
    %v604 = vld [vmem:[#allocation4 + $0x8] sm:$0xff]
    %v606 = vperm.slane %v35, 0
    %v607 = vperm.slane %v35, 1
    %v610 = vmul.f32 %v116, %v606
    %v611 = vmul.f32 %v117, %v607
    %v612 = vmul.f32 %v118, %v606
    %v613 = vmul.f32 %v119, %v607
    %614 = vmatpush.msra.mxu0 %v525
    %615 = vmatpush.msra.mxu0 %v524
    %616 = vmatpush.msra.mxu0 %v523
    %617 = vmatpush.msra.mxu0 %v522
    %618 = vmatpush.msra.mxu0 %v521
    %619 = vmatpush.msra.mxu0 %v520
    %620 = vmatpush.msra.mxu0 %v519
    %621 = vmatpush.msra.mxu0 %v518
    %622 = vmatpush.msra.mxu0 %v517
    %623 = vmatpush.msra.mxu0 %v516
    %624 = vmatpush.msra.mxu0 %v515
    %625 = vmatpush.msra.mxu0 %v514
    %626 = vmatpush.msra.mxu0 %v513
    %627 = vmatpush.msra.mxu0 %v512
    %628 = vmatpush.msra.mxu0 %v511
    %629 = vmatpush.msra.mxu0 %v510
    %630 = vmatmul.f32.gmra.mxu0 %v610
    %v631 = vpop.f32.mrf.mxu0
    %v632 = vadd.f32 0.0, %v631
    %633 = vmatmul.f32.gmra.mxu0 %v612
    %v634 = vpop.f32.mrf.mxu0
    %v635 = vadd.f32 0.0, %v634
    %636 = vdwg.mxu0
    %637 = vmatpush.msra.mxu0 %v541
    %638 = vmatpush.msra.mxu0 %v540
    %639 = vmatpush.msra.mxu0 %v539
    %640 = vmatpush.msra.mxu0 %v538
    %641 = vmatpush.msra.mxu0 %v537
    %642 = vmatpush.msra.mxu0 %v536
    %643 = vmatpush.msra.mxu0 %v535
    %644 = vmatpush.msra.mxu0 %v534
    %645 = vmatpush.msra.mxu0 %v533
    %646 = vmatpush.msra.mxu0 %v532
    %647 = vmatpush.msra.mxu0 %v531
    %648 = vmatpush.msra.mxu0 %v530
    %649 = vmatpush.msra.mxu0 %v529
    %650 = vmatpush.msra.mxu0 %v528
    %651 = vmatpush.msra.mxu0 %v527
    %652 = vmatpush.msra.mxu0 %v526
    %653 = vmatmul.f32.gmra.mxu0 %v611
    %v654 = vpop.f32.mrf.mxu0
    %v655 = vadd.f32 %v632, %v654
    %656 = vmatmul.f32.gmra.mxu0 %v613
    %v657 = vpop.f32.mrf.mxu0
    %v658 = vadd.f32 %v635, %v657
    %659 = vdwg.mxu0
    %v660 = vadd.f32 %v603, %v655
    %v661 = vadd.f32 %v604, %v658
    %662 = vst [vmem:[#allocation4] sm:$0xff] %v660
    %663 = vst [vmem:[#allocation4 + $0x8] sm:$0xff] %v661
    // Predicated region
    $region22: #{tpu_custom_call.1} parent=1 // pred_check
      _
    $region23: #{tpu_custom_call.1} parent=1 // pred_check_branch
      %665 = sbr.rel (0) target = $region25
    $region24: #{tpu_custom_call.1} parent=1 // pred_region
      %667 = vsyncadd [#allocation3], 0
      %s668 = sshll.u32 [#allocation2], 4
      %s669 = int_to_ptr.vmem [resolvable:$true] %s668
      %s670 = sshll.u32 %s4, 4
      %s671 = int_to_ptr.hbm [resolvable:$true] %s670
      %676 = dma.vmem_to_hbm [thread:$0]  %s669, 256, %s671, [#allocation3], 128, 128, 8
    $region25: #{tpu_custom_call.1} parent=1 // pred_fallthru
      _
    // Predicated region
    $region26: #{tpu_custom_call.1} parent=1 // pred_check
      _
    $region27: #{tpu_custom_call.1} parent=1 // pred_check_branch
      %678 = sbr.rel (0) target = $region29
    $region28: #{tpu_custom_call.1} parent=1 // pred_region
      %680 = vsyncadd [#allocation5], 0
      %s681 = sshll.u32 [#allocation4], 4
      %s682 = int_to_ptr.vmem [resolvable:$true] %s681
      %s683 = sshll.u32 %s5, 4
      %s684 = int_to_ptr.hbm [resolvable:$true] %s683
      %689 = dma.vmem_to_hbm [thread:$0]  %s682, 256, %s684, [#allocation5], 128, 128, 8
    $region29: #{tpu_custom_call.1} parent=1 // pred_fallthru
      _
    // Predicated region
    $region30: #{tpu_custom_call.1} parent=1 // pred_check
      _
    $region31: #{tpu_custom_call.1} parent=1 // pred_check_branch
      %691 = sbr.rel (0) target = $region33
    $region32: #{tpu_custom_call.1} parent=1 // pred_region
      %693 = dma.done [#allocation3], 256
    $region33: #{tpu_custom_call.1} parent=1 // pred_fallthru
      _
    // Predicated region
    $region34: #{tpu_custom_call.1} parent=1 // pred_check
      _
    $region35: #{tpu_custom_call.1} parent=1 // pred_check_branch
      %695 = sbr.rel (0) target = $region37
    $region36: #{tpu_custom_call.1} parent=1 // pred_region
      %697 = dma.done [#allocation5], 256
    $region37: #{tpu_custom_call.1} parent=1 // pred_fallthru
      _
    %698 = vsyncpa [#allocation3], 1
    %699 = vsyncpa [#allocation5], 1

</llo_original>
